<compile_context>
chip_gen: v7x
topology: tpu7x:2x2x1
jax: 0.10.0
libtpu: 0.0.40
codegen_flags: <defaults>
</compile_context>

<pallas_src>
import functools
import math

import jax
import jax.numpy as jnp
from jax import lax
from jax.experimental import pallas as pl
from jax.experimental.pallas import tpu as pltpu

_LANES = 128                 # vreg lane width
_SUBLANES = 8                # f32 sublane tile
_MAX_TILE_ROWS = 4096        # 4096 x 128 x 4B = 2 MiB per input per buffer
_SMALL_INPUT_ELEMS = 1 << 18  # below this, XLA's fused reduction wins


def _cdiv(a: int, b: int) -> int:
    return -(-a // b)


def _round_up(x: int, m: int) -> int:
    return -(-x // m) * m


def _num_tensorcores() -> int:
    """2 on megacore chips (v7x / v4 / v5p), else 1. Perf-only hint."""
    try:
        kind = jax.devices()[0].device_kind.lower()
    except Exception:
        return 1
    return 2 if any(tag in kind for tag in ("v7", "v4", "v5p")) else 1


def _mse_partial_kernel(pred_ref, label_ref, out_ref, *,
                        rows, num_cores, steps, tile_rows, needs_mask):
    """Accumulates sum((pred - label)^2) into a per-core (8,128) f32 block."""
    c = pl.program_id(0)
    s = pl.program_id(1)

    @pl.when(s == 0)
    def _init():
        out_ref[...] = jnp.zeros_like(out_ref)

    d = pred_ref[...].astype(jnp.float32) - label_ref[...].astype(jnp.float32)
    sq = d * d

    def _rowsum(x):
        # (tile_rows, 128) -> (tile_rows//8, 8, 128): groups whole (8,128)
        # vreg row-tiles, so the axis-0 sum is plain vreg-wise VPU adds — no
        # per-step cross-lane / cross-sublane XLU reduction.
        return jnp.sum(
            x.reshape(tile_rows // _SUBLANES, _SUBLANES, _LANES), axis=0)

    if needs_mask:
        # Only the globally-last block can be partial (guaranteed by the
        # wrapper's grid construction), so masking runs on one step only.
        is_last = jnp.logical_and(c == num_cores - 1, s == steps - 1)

        @pl.when(jnp.logical_not(is_last))
        def _full_tile():
            out_ref[...] += _rowsum(sq)

        @pl.when(is_last)
        def _ragged_tail():
            base_row = (c * steps + s) * tile_rows
            row_ids = base_row + lax.broadcasted_iota(
                jnp.int32, (tile_rows, _LANES), 0)
            out_ref[...] += _rowsum(jnp.where(row_ids < rows, sq, 0.0))
    else:
        out_ref[...] += _rowsum(sq)


def mse_loss_pallas(pred, label, *,
                    min_pallas_elems: int = _SMALL_INPUT_ELEMS,
                    max_tile_rows: int = _MAX_TILE_ROWS):
    """MSE with mean reduction (torch.nn.MSELoss default), Pallas-backed."""
    assert pred.shape == label.shape, (pred.shape, label.shape)
    total = int(math.prod(pred.shape)) if pred.shape else 1

    # Fast path: small inputs are dominated by launch/grid overhead, and
    # element counts that are not a multiple of 128 would need a full pad
    # copy through HBM — XLA's fused reduction is the right tool there.
    # TODO(synk): ragged (total % 128 != 0) large inputs fall back to XLA; a
    # 1-D-block Pallas variant with lane-level masking could cover them too.
    if total < max(min_pallas_elems, 1) or total % _LANES != 0:
        d = pred.astype(jnp.float32) - label.astype(jnp.float32)
        return jnp.mean(d * d)

    rows = total // _LANES
    # Lane-dense (rows, 128) view: pure reshape of a contiguous array (no HBM
    # pad/copy round-trip). Inputs keep their dtype (bf16 stays bf16 -> half
    # the HBM bytes); the kernel upcasts to f32 for the accumulation.
    pred2 = jnp.reshape(pred, (rows, _LANES))
    label2 = jnp.reshape(label, (rows, _LANES))

    # Sublane granularity by dtype: 8 rows (f32), 16 (bf16), 32 (int8/fp8).
    itemsize = max(jnp.dtype(pred.dtype).itemsize, 1)
    sub = _SUBLANES * max(4 // itemsize, 1)

    tile_rows = min(max_tile_rows, _round_up(rows, sub))
    total_blocks = _cdiv(rows, tile_rows)

    num_cores = _num_tensorcores()
    if num_cores > 1 and (rows < 2 * max_tile_rows
                          or total_blocks % num_cores != 0):
        num_cores = 1
    steps = total_blocks // num_cores
    needs_mask = (total_blocks * tile_rows != rows)

    kernel = functools.partial(
        _mse_partial_kernel, rows=rows, num_cores=num_cores, steps=steps,
        tile_rows=tile_rows, needs_mask=needs_mask)

    in_spec = pl.BlockSpec((tile_rows, _LANES), lambda c, s: (c * steps + s, 0))
    out_spec = pl.BlockSpec((_SUBLANES, _LANES), lambda c, s: (c, 0))

    # NOTE: if an xprof trace on v7x still shows exposed DMA between steps,
    # sweep pipeline_mode=pl.Buffered(3) on the two input specs.
    partials = pl.pallas_call(
        kernel,
        out_shape=jax.ShapeDtypeStruct((num_cores * _SUBLANES, _LANES),
                                       jnp.float32),
        grid_spec=pltpu.PrefetchScalarGridSpec(
            num_scalar_prefetch=0,
            grid=(num_cores, steps),
            in_specs=[in_spec, in_spec],
            out_specs=out_spec,
        ),
        compiler_params=pltpu.CompilerParams(
            dimension_semantics=("parallel", "arbitrary")),
    )(pred2, label2)

    # Masked / zero-initialized lanes contribute 0; divide by TRUE count.
    return jnp.sum(partials) / jnp.float32(total)


class LossOnDict:
    """JAX/Pallas port of rhodin LossOnDict: applies `loss` to dict entries."""

    def __init__(self, key, loss):
        self.key = key
        self.loss = loss

    def __call__(self, pred_dict, label_dict):
        return self.loss(pred_dict[self.key], label_dict[self.key])


if __name__ == "__main__":
    rng = jax.random.PRNGKey(0)
    k1, k2, k3, k4, k5, k6, k7, k8 = jax.random.split(rng, 8)

    # Force the Pallas path at demo sizes (production default routes <256K
    # element inputs to the XLA fast path).
    pallas_mse = functools.partial(mse_loss_pallas, min_pallas_elems=0)

    ok = True

    # 1) Pose-vector entry: (8, 64) = 512 elems = 4 rows -> exercises the
    #    ragged-row mask inside one 8-row tile.
    pred_pose = jax.random.normal(k1, (8, 64), dtype=jnp.float32)
    label_pose = jax.random.normal(k2, (8, 64), dtype=jnp.float32)
    crit = LossOnDict(key="3D", loss=pallas_mse)
    loss = crit({"3D": pred_pose}, {"3D": label_pose})
    jax.block_until_ready(loss)
    ref = jnp.mean((pred_pose - label_pose) ** 2)
    ok &= bool(jnp.allclose(loss, ref, rtol=1e-5, atol=1e-6))

    # 2) Heatmap-style entry: (2, 4, 16, 16) = 2048 elems = 16 exact rows.
    hm_pred = jax.random.normal(k3, (2, 4, 16, 16), dtype=jnp.float32)
    hm_label = jax.random.normal(k4, (2, 4, 16, 16), dtype=jnp.float32)
    crit_hm = LossOnDict(key="img_crop", loss=pallas_mse)
    loss_hm = crit_hm({"img_crop": hm_pred}, {"img_crop": hm_label})
    jax.block_until_ready(loss_hm)
    ref_hm = jnp.mean((hm_pred - hm_label) ** 2)
    ok &= bool(jnp.allclose(loss_hm, ref_hm, rtol=1e-5, atol=1e-6))

    # 3) bf16 entry with 15 rows (not a multiple of the packed sublane tile)
    #    -> exercises dtype-aware rounding + last-step masking.
    bp = jax.random.normal(k5, (3, 5, 128), dtype=jnp.float32).astype(jnp.bfloat16)
    bl = jax.random.normal(k6, (3, 5, 128), dtype=jnp.float32).astype(jnp.bfloat16)
    crit_b = LossOnDict(key="2D_heat", loss=pallas_mse)
    loss_b = crit_b({"2D_heat": bp}, {"2D_heat": bl})
    jax.block_until_ready(loss_b)
    ref_b = jnp.mean((bp.astype(jnp.float32) - bl.astype(jnp.float32)) ** 2)
    ok &= bool(jnp.allclose(loss_b, ref_b, rtol=1e-5, atol=1e-6))

    # 4) Multi-step accumulation path: (4, 8, 128) = 32 rows with a forced
    #    8-row tile -> 4 sequential grid steps on the resident accumulator.
    mp = jax.random.normal(k7, (4, 8, 128), dtype=jnp.float32)
    ml = jax.random.normal(k8, (4, 8, 128), dtype=jnp.float32)
    loss_ms = mse_loss_pallas(mp, ml, min_pallas_elems=0, max_tile_rows=8)
    jax.block_until_ready(loss_ms)
    ref_ms = jnp.mean((mp - ml) ** 2)
    ok &= bool(jnp.allclose(loss_ms, ref_ms, rtol=1e-5, atol=1e-6))

    # 5) Default config exercises the XLA small-input fast path.
    crit_small = LossOnDict(key="3D", loss=mse_loss_pallas)
    loss_small = crit_small({"3D": pred_pose}, {"3D": label_pose})
    jax.block_until_ready(loss_small)
    ok &= bool(jnp.allclose(loss_small, ref, rtol=1e-5, atol=1e-6))

    if not ok:
        raise SystemExit("MISMATCH")
    print("KERNEL_OK")
</pallas_src>

<mosaic_0001>
module attributes {stable_mosaic.version = 11 : i64} {
  func.func @_mse_partial_kernel(%arg0: i32, %arg1: i32, %arg2: memref<8x128xf32, #tpu.memory_space<vmem>>, %arg3: memref<8x128xf32, #tpu.memory_space<vmem>>, %arg4: memref<8x128xf32, #tpu.memory_space<vmem>>) attributes {dimension_semantics = [#tpu.dimension_semantics<parallel>, #tpu.dimension_semantics<arbitrary>], iteration_bounds = array<i64: 1, 1>, scalar_prefetch = 0 : i64, scratch_operands = 0 : i64, tpu.core_type = #tpu.core_type<tc>, window_params = [{transform_indices = @transform_0, window_bounds = array<i64: 8, 128>}, {transform_indices = @transform_1, window_bounds = array<i64: 8, 128>}, {transform_indices = @transform_2, window_bounds = array<i64: 8, 128>}]} {
    %c0_i32 = arith.constant 0 : i32
    %0 = arith.cmpi eq, %arg1, %c0_i32 : i32
    %1 = arith.extui %0 : i1 to i32
    %c0_i32_0 = arith.constant 0 : i32
    %2 = arith.cmpi ne, %1, %c0_i32_0 : i32
    scf.if %2 {
      %cst = arith.constant 0.000000e+00 : f32
      %15 = vector.broadcast %cst : f32 to vector<8x128xf32>
      %c0_8 = arith.constant 0 : index
      %c0_9 = arith.constant 0 : index
      %16 = vector.load %arg4[%c0_8, %c0_9] : memref<8x128xf32, #tpu.memory_space<vmem>>, vector<8x128xf32>
      tpu.vector_store %arg4[%c0_8, %c0_9], %15 {strides = array<i32>} : memref<8x128xf32, #tpu.memory_space<vmem>>, vector<8x128xf32>,
    } else {
    }
    %c0 = arith.constant 0 : index
    %c0_1 = arith.constant 0 : index
    %3 = vector.load %arg2[%c0, %c0_1] : memref<8x128xf32, #tpu.memory_space<vmem>>, vector<8x128xf32>
    %c0_2 = arith.constant 0 : index
    %c0_3 = arith.constant 0 : index
    %4 = vector.load %arg3[%c0_2, %c0_3] : memref<8x128xf32, #tpu.memory_space<vmem>>, vector<8x128xf32>
    %5 = arith.subf %3, %4 : vector<8x128xf32>
    %6 = arith.mulf %5, %5 : vector<8x128xf32>
    %c0_i32_4 = arith.constant 0 : i32
    %7 = arith.cmpi eq, %arg0, %c0_i32_4 : i32
    %c0_i32_5 = arith.constant 0 : i32
    %8 = arith.cmpi eq, %arg1, %c0_i32_5 : i32
    %9 = arith.andi %7, %8 : i1
    %true = arith.constant true
    %10 = arith.xori %9, %true : i1
    %11 = arith.extui %10 : i1 to i32
    %c0_i32_6 = arith.constant 0 : i32
    %12 = arith.cmpi ne, %11, %c0_i32_6 : i32
    scf.if %12 {
      %c0_8 = arith.constant 0 : index
      %c0_9 = arith.constant 0 : index
      %15 = vector.load %arg4[%c0_8, %c0_9] : memref<8x128xf32, #tpu.memory_space<vmem>>, vector<8x128xf32>
      %16 = vector.shape_cast %6 : vector<8x128xf32> to vector<1x8x128xf32>
      %cst = arith.constant dense<0.000000e+00> : vector<8x128xf32>
      %17 = vector.multi_reduction <add>, %16, %cst [0] : vector<1x8x128xf32> to vector<8x128xf32>
      %18 = arith.addf %15, %17 : vector<8x128xf32>
      %c0_10 = arith.constant 0 : index
      %c0_11 = arith.constant 0 : index
      %19 = vector.load %arg4[%c0_10, %c0_11] : memref<8x128xf32, #tpu.memory_space<vmem>>, vector<8x128xf32>
      tpu.vector_store %arg4[%c0_10, %c0_11], %18 {strides = array<i32>} : memref<8x128xf32, #tpu.memory_space<vmem>>, vector<8x128xf32>,
    } else {
    }
    %13 = arith.extui %9 : i1 to i32
    %c0_i32_7 = arith.constant 0 : i32
    %14 = arith.cmpi ne, %13, %c0_i32_7 : i32
    scf.if %14 {
      %c1_i32 = arith.constant 1 : i32
      %15 = arith.muli %arg0, %c1_i32 : i32
      %16 = arith.addi %15, %arg1 : i32
      %c8_i32 = arith.constant 8 : i32
      %17 = arith.muli %16, %c8_i32 : i32
      %18 = tpu.iota {dimensions = array<i32: 0>} : vector<8x128xi32>
      %19 = vector.broadcast %17 : i32 to vector<8x128xi32>
      %20 = arith.addi %19, %18 : vector<8x128xi32>
      %c0_8 = arith.constant 0 : index
      %c0_9 = arith.constant 0 : index
      %21 = vector.load %arg4[%c0_8, %c0_9] : memref<8x128xf32, #tpu.memory_space<vmem>>, vector<8x128xf32>
      %c4_i32 = arith.constant 4 : i32
      %22 = vector.broadcast %c4_i32 : i32 to vector<8x128xi32>
      %23 = arith.cmpi slt, %20, %22 : vector<8x128xi32>
      %cst = arith.constant 0.000000e+00 : f32
      %24 = vector.broadcast %cst : f32 to vector<8x128xf32>
      %25 = arith.select %23, %6, %24 : vector<8x128xi1>, vector<8x128xf32>
      %26 = vector.shape_cast %25 : vector<8x128xf32> to vector<1x8x128xf32>
      %cst_10 = arith.constant dense<0.000000e+00> : vector<8x128xf32>
      %27 = vector.multi_reduction <add>, %26, %cst_10 [0] : vector<1x8x128xf32> to vector<8x128xf32>
      %28 = arith.addf %21, %27 : vector<8x128xf32>
      %c0_11 = arith.constant 0 : index
      %c0_12 = arith.constant 0 : index
      %29 = vector.load %arg4[%c0_11, %c0_12] : memref<8x128xf32, #tpu.memory_space<vmem>>, vector<8x128xf32>
      tpu.vector_store %arg4[%c0_11, %c0_12], %28 {strides = array<i32>} : memref<8x128xf32, #tpu.memory_space<vmem>>, vector<8x128xf32>,
    } else {
    }
    return
  }
  func.func @transform_0(%arg0: i32, %arg1: i32) -> (i32, i32) {
    %c1_i32 = arith.constant 1 : i32
    %0 = arith.muli %arg0, %c1_i32 : i32
    %1 = arith.addi %0, %arg1 : i32
    %c0_i32 = arith.constant 0 : i32
    %c0_i32_0 = arith.constant 0 : i32
    return %1, %c0_i32 : i32, i32
  }
  func.func @transform_1(%arg0: i32, %arg1: i32) -> (i32, i32) {
    %c1_i32 = arith.constant 1 : i32
    %0 = arith.muli %arg0, %c1_i32 : i32
    %1 = arith.addi %0, %arg1 : i32
    %c0_i32 = arith.constant 0 : i32
    %c0_i32_0 = arith.constant 0 : i32
    return %1, %c0_i32 : i32, i32
  }
  func.func @transform_2(%arg0: i32, %arg1: i32) -> (i32, i32) {
    %c0_i32 = arith.constant 0 : i32
    %c0_i32_0 = arith.constant 0 : i32
    return %arg0, %c0_i32 : i32, i32
  }
}

</mosaic_0001>

<llo_original>
// kernel: tpu_custom_call.1
$region0: #{tpu_custom_call.1}
  #allocation0 [shape = 'u32[]', space=smem, size = 0x4, offset = 0x4, fixed_abs, tag = 'smem constant byte address 0x4 - core index']
  #allocation1 [shape = 'u32[144,128]{1,0:T(1,128)}', space=vmem, size = 0x12000, scoped, tag = 'internal scratch']
  %s0 = inlined_call_operand.hbm [shape: f32[4,128], index: 0, kind: input, shape index: {}]
  %s1 = inlined_call_operand.hbm [shape: f32[4,128], index: 1, kind: input, shape index: {}]
  %s2 = inlined_call_operand.hbm [shape: f32[8,128], index: 2, kind: output, shape index: {}]
  %s3 = sld [smem:[#allocation0]]
  $region38: #{tpu_custom_call.1} parent=0
    _
  %s5 = ssub.s32 1, %s3
  %s6 = scalar_select 0, %s5, %s3
  $region1: #{tpu_custom_call.1} parent=0
    #allocation2 [shape = 'u8[4096]{0}', space=vmem, size = 0x1000, scoped, tag = 'input window, operand 0, single buffered']
    #allocation3 [shape = 's32[1]{0}', space=sflag, size = 0x4, scoped, tag = 'scoped memory for tpu_custom_call.1']
    #allocation4 [shape = 's32[1]{0}', space=sflag, size = 0x4, scoped, tag = 'scoped memory for tpu_custom_call.1']
    #allocation5 [shape = 'u8[4096]{0}', space=vmem, size = 0x1000, scoped, tag = 'input window, operand 1, single buffered']
    #allocation6 [shape = 's32[1]{0}', space=sflag, size = 0x4, scoped, tag = 'scoped memory for tpu_custom_call.1']
    #allocation7 [shape = 'u8[4096]{0}', space=vmem, size = 0x1000, scoped, tag = 'output window, operand 0, single buffered']
    %7 = vsyncpa [#allocation3], 0
    %8 = vsyncpa [#allocation6], 0
    %9 = vsyncpa [#allocation4], 0
    // Predicated region
    $region2: #{tpu_custom_call.1} parent=1 // pred_check
      _
    $region3: #{tpu_custom_call.1} parent=1 // pred_check_branch
      %11 = sbr.rel (0) target = $region5
    $region4: #{tpu_custom_call.1} parent=1 // pred_region
      %s12 = sadd.s32 0, 0
      %s13 = smul.u32 2, %s12
      %s14 = ssub.s32 1, %s13
      %s15 = smul.u32 64, %s14
      %s17 = ssub.s32 128, %s15
      %18 = vsyncadd [#allocation3], %s17
      %p19 = scmp.ne.s32.totalorder 0, %s15
      %s20 = smul.addr %s13, 64
      %s21 = scalar_lea.hbm %s0, %s20
      %s22 = smul.u32 4, %s14
      %s23 = sshll.u32 [#allocation2], 4
      %s24 = int_to_ptr.vmem [resolvable:$true] %s23
      %s25 = sshll.u32 %s22, 4
      %29 = dma.hbm_to_vmem [thread:$0]  (%p19), %s21, %s25, %s24, [#allocation3], 64, 64, 4
    $region5: #{tpu_custom_call.1} parent=1 // pred_fallthru
      _
    // Predicated region
    $region6: #{tpu_custom_call.1} parent=1 // pred_check
      _
    $region7: #{tpu_custom_call.1} parent=1 // pred_check_branch
      %31 = sbr.rel (0) target = $region9
    $region8: #{tpu_custom_call.1} parent=1 // pred_region
      %s32 = sadd.s32 0, 0
      %s33 = smul.u32 2, %s32
      %s34 = ssub.s32 1, %s33
      %s35 = smul.u32 64, %s34
      %s37 = ssub.s32 128, %s35
      %38 = vsyncadd [#allocation6], %s37
      %p39 = scmp.ne.s32.totalorder 0, %s35
      %s40 = smul.addr %s33, 64
      %s41 = scalar_lea.hbm %s1, %s40
      %s42 = smul.u32 4, %s34
      %s43 = sshll.u32 [#allocation5], 4
      %s44 = int_to_ptr.vmem [resolvable:$true] %s43
      %s45 = sshll.u32 %s42, 4
      %49 = dma.hbm_to_vmem [thread:$0]  (%p39), %s41, %s45, %s44, [#allocation6], 64, 64, 4
    $region9: #{tpu_custom_call.1} parent=1 // pred_fallthru
      _
    // Predicated region
    $region10: #{tpu_custom_call.1} parent=1 // pred_check
      _
    $region11: #{tpu_custom_call.1} parent=1 // pred_check_branch
      %51 = sbr.rel (0) target = $region13
    $region12: #{tpu_custom_call.1} parent=1 // pred_region
      %52 = dma.done [#allocation3], 128
    $region13: #{tpu_custom_call.1} parent=1 // pred_fallthru
      _
    // Predicated region
    $region14: #{tpu_custom_call.1} parent=1 // pred_check
      _
    $region15: #{tpu_custom_call.1} parent=1 // pred_check_branch
      %54 = sbr.rel (0) target = $region17
    $region16: #{tpu_custom_call.1} parent=1 // pred_region
      %55 = dma.done [#allocation6], 128
    $region17: #{tpu_custom_call.1} parent=1 // pred_fallthru
      _
    %s56 = sadd.s32 0, 0
    %s57 = smul.u32 2, %s56
    %s58 = ssub.s32 1, %s57
    %s59 = smul.u32 64, %s58
    %s60 = sadd.s32 0, 0
    %s61 = smul.u32 2, %s60
    %s62 = ssub.s32 1, %s61
    %s63 = smul.u32 64, %s62
    %p64 = scmp.eq.s32.totalorder 0, 0
    // Predicated region
    $region18: #{tpu_custom_call.1} parent=1 // pred_check
      %p65 = pneg %p64
    $region19: #{tpu_custom_call.1} parent=1 // pred_check_branch
      %67 = sbr.rel (%p65) target = $region21
    $region20: #{tpu_custom_call.1} parent=1 // pred_region
      %68 = vst [vmem:[#allocation7] sm:$0xff] 0.0
    $region21: #{tpu_custom_call.1} parent=1 // pred_fallthru
      _
    %v69 = vld [vmem:[#allocation2] sm:$0xff]
    %v70 = vld [vmem:[#allocation5] sm:$0xff]
    %v71 = vsub.f32 %v69, %v70
    %v72 = vmul.f32 %v71, %v71
    %p73 = scmp.eq.s32.totalorder 0, 0
    %p74 = pnand %p73, %p64
    %p75 = pneg %p74
    // Predicated region
    $region22: #{tpu_custom_call.1} parent=1 // pred_check
      _
    $region23: #{tpu_custom_call.1} parent=1 // pred_check_branch
      %77 = sbr.rel (%p74) target = $region25
    $region24: #{tpu_custom_call.1} parent=1 // pred_region
      %s78 = sadd.s32 0, 0
      %s79 = smul.u32 %s78, 8
      %v80 = vlaneseq
      %v81 = vshrl.u32 %v80, 7
      %v82 = vstv %s79
      %v83 = vadd.s32 %v82, %v81
      %v84 = vld [vmem:[#allocation7] sm:$0xff]
      %vm85 = vcmp.lt.s32.totalorder %v83, 4
      %v86 = vsel %vm85, %v72, 0.0
      %v87 = vadd.f32 %v86, 0.0
      %v88 = vadd.f32 %v84, %v87
      %89 = vst [vmem:[#allocation7] sm:$0xff] %v88
    $region25: #{tpu_custom_call.1} parent=1 // pred_fallthru
      _
    // Predicated region
    $region26: #{tpu_custom_call.1} parent=1 // pred_check
      %p90 = pneg %p74
    $region27: #{tpu_custom_call.1} parent=1 // pred_check_branch
      %92 = sbr.rel (%p90) target = $region29
    $region28: #{tpu_custom_call.1} parent=1 // pred_region
      %v93 = vld [vmem:[#allocation7] sm:$0xff]
      %v94 = vadd.f32 %v72, 0.0
      %v95 = vadd.f32 %v93, %v94
      %96 = vst [vmem:[#allocation7] sm:$0xff] %v95
    $region29: #{tpu_custom_call.1} parent=1 // pred_fallthru
      _
    // Predicated region
    $region30: #{tpu_custom_call.1} parent=1 // pred_check
      _
    $region31: #{tpu_custom_call.1} parent=1 // pred_check_branch
      %98 = sbr.rel (0) target = $region33
    $region32: #{tpu_custom_call.1} parent=1 // pred_region
      %s100 = ssub.s32 128, 128
      %101 = vsyncadd [#allocation4], %s100
      %s103 = sshll.u32 [#allocation7], 4
      %s104 = int_to_ptr.vmem [resolvable:$true] %s103
      %106 = dma.vmem_to_hbm [thread:$0]  %s104, 128, %s2, [#allocation4]
    $region33: #{tpu_custom_call.1} parent=1 // pred_fallthru
      _
    // Predicated region
    $region34: #{tpu_custom_call.1} parent=1 // pred_check
      _
    $region35: #{tpu_custom_call.1} parent=1 // pred_check_branch
      %108 = sbr.rel (0) target = $region37
    $region36: #{tpu_custom_call.1} parent=1 // pred_region
      %109 = dma.done [#allocation4], 128
    $region37: #{tpu_custom_call.1} parent=1 // pred_fallthru
      _
    %110 = vsyncpa [#allocation3], 1
    %111 = vsyncpa [#allocation6], 1
    %112 = vsyncpa [#allocation4], 1

</llo_original>
